<compile_context>
chip_gen: v7x
topology: tpu7x:2x2x1
jax: 0.10.0
libtpu: 0.0.40
codegen_flags: <defaults>
</compile_context>

<pallas_src>
import functools

import jax
import jax.numpy as jnp
from jax.experimental import pallas as pl
from jax.experimental.pallas import tpu as pltpu

EPS = 1e-5  # nn.InstanceNorm2d default


def _write_shifted_patches(z, H, W, is_w0, is_wlast, patch_ref):
    """Write the 9 reflect-padded 3x3 shifts of z into the im2col scratch.

    z: (C, H*W) f32, row-major flattened spatial (lane-dense).
    patch_ref: (9*C, H*W) VMEM scratch.  Row block k = kh*3 + kw holds
      z[refl(h + kh - 1), refl(w + kw - 1)], i.e. the reflection-padded patch.
    """
    C, HW = z.shape

    def row_shift(a):
        # value at row h is z[refl(h + a)]  (reflection pad along H)
        if a == 0:
            return z
        if a == -1:  # rows shift down; row 0 reflects to row 1
            return jnp.concatenate([z[:, W:2 * W], z[:, :HW - W]], axis=-1)
        # a == +1: rows shift up; last row reflects to row H-2
        return jnp.concatenate([z[:, W:], z[:, HW - 2 * W:HW - W]], axis=-1)

    for a in (-1, 0, 1):
        r = row_shift(a)
        # Lane shifts by +-1; the row-wrap lanes are fixed by the selects below.
        minus = jnp.concatenate([r[:, HW - 1:], r[:, :HW - 1]], axis=-1)  # r[p-1]
        plus = jnp.concatenate([r[:, 1:], r[:, :1]], axis=-1)             # r[p+1]
        left = jnp.where(is_w0, plus, minus)      # b = -1: reflect at w == 0
        right = jnp.where(is_wlast, minus, plus)  # b = +1: reflect at w == W-1
        for b, s in ((-1, left), (0, r), (1, right)):
            k = (a + 1) * 3 + (b + 1)             # k = kh*3 + kw
            patch_ref[pl.ds(k * C, C), :] = s


def _conv3x3_instance_norm(z, w_mat, H, W, is_w0, is_wlast, patch_ref):
    """3x3 reflect-pad conv (bias-free) + InstanceNorm.  z, result: (C, H*W)."""
    _write_shifted_patches(z, H, W, is_w0, is_wlast, patch_ref)
    # Single im2col matmul on the MXU: (Cout, 9*Cin) @ (9*Cin, H*W).
    acc = jnp.dot(w_mat, patch_ref[...], preferred_element_type=jnp.float32)
    inv_n = 1.0 / (H * W)
    mean = jnp.sum(acc, axis=-1, keepdims=True) * inv_n
    mean_sq = jnp.sum(acc * acc, axis=-1, keepdims=True) * inv_n
    var = jnp.maximum(mean_sq - mean * mean, 0.0)  # one-pass, biased (torch IN)
    return (acc - mean) * jax.lax.rsqrt(var + EPS)


def resnet_block_kernel(x_ref, col_ref, w1_ref, w2_ref, o_ref, patch_ref, *, H, W):
    """Fused: conv1 -> IN -> ReLU -> conv2 -> IN -> residual add."""
    x = x_ref[0]                               # (C, H*W), lane-dense
    col = col_ref[...]                         # (1, H*W) int32: w index per lane
    is_w0 = col == 0
    is_wlast = col == W - 1

    y = _conv3x3_instance_norm(x, w1_ref[...], H, W, is_w0, is_wlast, patch_ref)
    y = jnp.maximum(y, 0.0)                    # ReLU (use_dropout=False: no dropout)
    y = _conv3x3_instance_norm(y, w2_ref[...], H, W, is_w0, is_wlast, patch_ref)
    o_ref[0] = x + y                           # residual skip connection


@jax.jit
def resnet_block_forward(x_nchw, w1_oihw, b1, w2_oihw, b2):
    """ResnetBlock forward.  Weights in PyTorch layout (Cout, Cin, 3, 3).

    b1/b2 are accepted for interface parity but unused: with non-affine
    InstanceNorm the conv bias is exactly cancelled by the mean subtraction.
    """
    del b1, b2
    N, C, H, W = x_nchw.shape
    HW = H * W
    x = x_nchw.astype(jnp.float32).reshape(N, C, HW)
    # (Cout, Cin, 3, 3) -> (Cout, 9*Cin) with row order (kh*3 + kw)*Cin + ci,
    # matching the im2col scratch layout.
    w1 = jnp.transpose(w1_oihw, (0, 2, 3, 1)).reshape(C, 9 * C).astype(jnp.float32)
    w2 = jnp.transpose(w2_oihw, (0, 2, 3, 1)).reshape(C, 9 * C).astype(jnp.float32)
    # Per-lane column index (precomputed outside the kernel: no in-kernel int mod).
    col_ids = (jnp.arange(HW, dtype=jnp.int32) % W).reshape(1, HW)

    kernel = functools.partial(resnet_block_kernel, H=H, W=W)
    out = pl.pallas_call(
        kernel,
        out_shape=jax.ShapeDtypeStruct((N, C, HW), jnp.float32),
        grid=(N,),
        in_specs=[
            pl.BlockSpec((1, C, HW), lambda n: (n, 0, 0)),   # x (per batch)
            pl.BlockSpec((1, HW), lambda n: (0, 0)),         # col ids (resident)
            pl.BlockSpec((C, 9 * C), lambda n: (0, 0)),      # w1 (resident)
            pl.BlockSpec((C, 9 * C), lambda n: (0, 0)),      # w2 (resident)
        ],
        out_specs=pl.BlockSpec((1, C, HW), lambda n: (n, 0, 0)),  # lane-dense out
        scratch_shapes=[pltpu.VMEM((9 * C, HW), jnp.float32)],    # im2col buffer
        compiler_params=pltpu.CompilerParams(dimension_semantics=("parallel",)),
    )(x, col_ids, w1, w2)
    return out.reshape(N, C, H, W)


def _reference_forward(x, w1, b1, w2, b2):
    """Pure-JAX reference in NCHW, faithful to the PyTorch module (incl. bias)."""
    def block(h, w, b):
        hpad = jnp.pad(h, ((0, 0), (0, 0), (1, 1), (1, 1)), mode="reflect")
        y = jax.lax.conv_general_dilated(
            hpad, w, window_strides=(1, 1), padding="VALID",
            dimension_numbers=("NCHW", "OIHW", "NCHW"),
            precision=jax.lax.Precision.HIGHEST)
        y = y + b.reshape(1, -1, 1, 1)
        mean = jnp.mean(y, axis=(2, 3), keepdims=True)
        var = jnp.mean((y - mean) ** 2, axis=(2, 3), keepdims=True)  # biased
        return (y - mean) * jax.lax.rsqrt(var + EPS)

    x = x.astype(jnp.float32)
    y = jnp.maximum(block(x, w1, b1), 0.0)
    y = block(y, w2, b2)
    return x + y


if __name__ == "__main__":
    N, C, H, W = 2, 4, 16, 16
    key = jax.random.PRNGKey(0)
    kx, kw1, kb1, kw2, kb2 = jax.random.split(key, 5)

    x = jax.random.normal(kx, (N, C, H, W), dtype=jnp.float32)
    # PyTorch-shaped parameters: Conv2d weight (Cout, Cin, 3, 3), bias (Cout,)
    w1 = jax.random.normal(kw1, (C, C, 3, 3), dtype=jnp.float32) * 0.1
    w2 = jax.random.normal(kw2, (C, C, 3, 3), dtype=jnp.float32) * 0.1
    b1 = jax.random.normal(kb1, (C,), dtype=jnp.float32) * 0.1
    b2 = jax.random.normal(kb2, (C,), dtype=jnp.float32) * 0.1

    out = resnet_block_forward(x, w1, b1, w2, b2)
    out = jax.block_until_ready(out)

    ref = _reference_forward(x, w1, b1, w2, b2)
    assert out.shape == (N, C, H, W)
    assert jnp.allclose(out, ref, atol=1e-4, rtol=1e-4), "mismatch vs reference"

    print("KERNEL_OK")
</pallas_src>

<mosaic_0001>
module attributes {stable_mosaic.version = 11 : i64} {
  func.func @resnet_block_kernel(%arg0: i32, %arg1: memref<1x4x256xf32, #tpu.memory_space<vmem>>, %arg2: memref<1x256xi32, #tpu.memory_space<vmem>>, %arg3: memref<4x36xf32, #tpu.memory_space<vmem>>, %arg4: memref<4x36xf32, #tpu.memory_space<vmem>>, %arg5: memref<1x4x256xf32, #tpu.memory_space<vmem>>, %arg6: memref<36x256xf32, #tpu.memory_space<vmem>>) attributes {dimension_semantics = [#tpu.dimension_semantics<parallel>], iteration_bounds = array<i64: 2>, scalar_prefetch = 0 : i64, scratch_operands = 1 : i64, tpu.core_type = #tpu.core_type<tc>, window_params = [{transform_indices = @transform_0, window_bounds = array<i64: 1, 4, 256>}, {pipeline_mode = #tpu.pipeline_mode<synchronous>, transform_indices = @transform_1, window_bounds = array<i64: 1, 256>}, {pipeline_mode = #tpu.pipeline_mode<synchronous>, transform_indices = @transform_2, window_bounds = array<i64: 4, 36>}, {pipeline_mode = #tpu.pipeline_mode<synchronous>, transform_indices = @transform_3, window_bounds = array<i64: 4, 36>}, {transform_indices = @transform_4, window_bounds = array<i64: 1, 4, 256>}]} {
    %c0 = arith.constant 0 : index
    %c0_0 = arith.constant 0 : index
    %c0_1 = arith.constant 0 : index
    %0 = vector.load %arg1[%c0, %c0_0, %c0_1] : memref<1x4x256xf32, #tpu.memory_space<vmem>>, vector<1x4x256xf32>
    %1 = vector.shape_cast %0 : vector<1x4x256xf32> to vector<4x256xf32>
    %c0_2 = arith.constant 0 : index
    %c0_3 = arith.constant 0 : index
    %2 = vector.load %arg2[%c0_2, %c0_3] : memref<1x256xi32, #tpu.memory_space<vmem>>, vector<1x256xi32>
    %c0_i32 = arith.constant 0 : i32
    %3 = vector.broadcast %c0_i32 : i32 to vector<1x256xi32>
    %4 = arith.cmpi eq, %2, %3 : vector<1x256xi32>
    %c15_i32 = arith.constant 15 : i32
    %5 = vector.broadcast %c15_i32 : i32 to vector<1x256xi32>
    %6 = arith.cmpi eq, %2, %5 : vector<1x256xi32>
    %c0_4 = arith.constant 0 : index
    %c0_5 = arith.constant 0 : index
    %7 = vector.load %arg3[%c0_4, %c0_5] : memref<4x36xf32, #tpu.memory_space<vmem>>, vector<4x36xf32>
    %8 = vector.extract_strided_slice %1 {offsets = [0, 16], sizes = [4, 16], strides = [1, 1]} : vector<4x256xf32> to vector<4x16xf32>
    %9 = vector.extract_strided_slice %1 {offsets = [0, 0], sizes = [4, 240], strides = [1, 1]} : vector<4x256xf32> to vector<4x240xf32>
    %10 = tpu.concatenate %8, %9 in 1 : vector<4x16xf32>, vector<4x240xf32> -> vector<4x256xf32>
    %11 = vector.extract_strided_slice %10 {offsets = [0, 255], sizes = [4, 1], strides = [1, 1]} : vector<4x256xf32> to vector<4x1xf32>
    %12 = vector.extract_strided_slice %10 {offsets = [0, 0], sizes = [4, 255], strides = [1, 1]} : vector<4x256xf32> to vector<4x255xf32>
    %13 = tpu.concatenate %11, %12 in 1 : vector<4x1xf32>, vector<4x255xf32> -> vector<4x256xf32>
    %14 = vector.extract_strided_slice %10 {offsets = [0, 1], sizes = [4, 255], strides = [1, 1]} : vector<4x256xf32> to vector<4x255xf32>
    %15 = vector.extract_strided_slice %10 {offsets = [0, 0], sizes = [4, 1], strides = [1, 1]} : vector<4x256xf32> to vector<4x1xf32>
    %16 = tpu.concatenate %14, %15 in 1 : vector<4x255xf32>, vector<4x1xf32> -> vector<4x256xf32>
    %17 = vector.shape_cast %4 : vector<1x256xi1> to vector<1x256xi1>
    %18 = vector.broadcast %17 : vector<1x256xi1> to vector<4x256xi1>
    %19 = arith.select %18, %16, %13 : vector<4x256xi1>, vector<4x256xf32>
    %20 = vector.shape_cast %6 : vector<1x256xi1> to vector<1x256xi1>
    %21 = vector.broadcast %20 : vector<1x256xi1> to vector<4x256xi1>
    %22 = arith.select %21, %13, %16 : vector<4x256xi1>, vector<4x256xf32>
    %c0_6 = arith.constant 0 : index
    %c0_7 = arith.constant 0 : index
    %23 = vector.load %arg6[%c0_6, %c0_7] : memref<36x256xf32, #tpu.memory_space<vmem>>, vector<4x256xf32>
    tpu.vector_store %arg6[%c0_6, %c0_7], %19 {strides = array<i32>} : memref<36x256xf32, #tpu.memory_space<vmem>>, vector<4x256xf32>,
    %c4 = arith.constant 4 : index
    %c0_8 = arith.constant 0 : index
    %24 = vector.load %arg6[%c4, %c0_8] : memref<36x256xf32, #tpu.memory_space<vmem>>, vector<4x256xf32>
    tpu.vector_store %arg6[%c4, %c0_8], %10 {strides = array<i32>} : memref<36x256xf32, #tpu.memory_space<vmem>>, vector<4x256xf32>,
    %c8 = arith.constant 8 : index
    %c0_9 = arith.constant 0 : index
    %25 = vector.load %arg6[%c8, %c0_9] : memref<36x256xf32, #tpu.memory_space<vmem>>, vector<4x256xf32>
    tpu.vector_store %arg6[%c8, %c0_9], %22 {strides = array<i32>} : memref<36x256xf32, #tpu.memory_space<vmem>>, vector<4x256xf32>,
    %26 = vector.extract_strided_slice %1 {offsets = [0, 255], sizes = [4, 1], strides = [1, 1]} : vector<4x256xf32> to vector<4x1xf32>
    %27 = vector.extract_strided_slice %1 {offsets = [0, 0], sizes = [4, 255], strides = [1, 1]} : vector<4x256xf32> to vector<4x255xf32>
    %28 = tpu.concatenate %26, %27 in 1 : vector<4x1xf32>, vector<4x255xf32> -> vector<4x256xf32>
    %29 = vector.extract_strided_slice %1 {offsets = [0, 1], sizes = [4, 255], strides = [1, 1]} : vector<4x256xf32> to vector<4x255xf32>
    %30 = vector.extract_strided_slice %1 {offsets = [0, 0], sizes = [4, 1], strides = [1, 1]} : vector<4x256xf32> to vector<4x1xf32>
    %31 = tpu.concatenate %29, %30 in 1 : vector<4x255xf32>, vector<4x1xf32> -> vector<4x256xf32>
    %32 = vector.shape_cast %4 : vector<1x256xi1> to vector<1x256xi1>
    %33 = vector.broadcast %32 : vector<1x256xi1> to vector<4x256xi1>
    %34 = arith.select %33, %31, %28 : vector<4x256xi1>, vector<4x256xf32>
    %35 = vector.shape_cast %6 : vector<1x256xi1> to vector<1x256xi1>
    %36 = vector.broadcast %35 : vector<1x256xi1> to vector<4x256xi1>
    %37 = arith.select %36, %28, %31 : vector<4x256xi1>, vector<4x256xf32>
    %c12 = arith.constant 12 : index
    %c0_10 = arith.constant 0 : index
    %38 = vector.load %arg6[%c12, %c0_10] : memref<36x256xf32, #tpu.memory_space<vmem>>, vector<4x256xf32>
    tpu.vector_store %arg6[%c12, %c0_10], %34 {strides = array<i32>} : memref<36x256xf32, #tpu.memory_space<vmem>>, vector<4x256xf32>,
    %c16 = arith.constant 16 : index
    %c0_11 = arith.constant 0 : index
    %39 = vector.load %arg6[%c16, %c0_11] : memref<36x256xf32, #tpu.memory_space<vmem>>, vector<4x256xf32>
    tpu.vector_store %arg6[%c16, %c0_11], %1 {strides = array<i32>} : memref<36x256xf32, #tpu.memory_space<vmem>>, vector<4x256xf32>,
    %c20 = arith.constant 20 : index
    %c0_12 = arith.constant 0 : index
    %40 = vector.load %arg6[%c20, %c0_12] : memref<36x256xf32, #tpu.memory_space<vmem>>, vector<4x256xf32>
    tpu.vector_store %arg6[%c20, %c0_12], %37 {strides = array<i32>} : memref<36x256xf32, #tpu.memory_space<vmem>>, vector<4x256xf32>,
    %41 = vector.extract_strided_slice %1 {offsets = [0, 16], sizes = [4, 240], strides = [1, 1]} : vector<4x256xf32> to vector<4x240xf32>
    %42 = vector.extract_strided_slice %1 {offsets = [0, 224], sizes = [4, 16], strides = [1, 1]} : vector<4x256xf32> to vector<4x16xf32>
    %43 = tpu.concatenate %41, %42 in 1 : vector<4x240xf32>, vector<4x16xf32> -> vector<4x256xf32>
    %44 = vector.extract_strided_slice %43 {offsets = [0, 255], sizes = [4, 1], strides = [1, 1]} : vector<4x256xf32> to vector<4x1xf32>
    %45 = vector.extract_strided_slice %43 {offsets = [0, 0], sizes = [4, 255], strides = [1, 1]} : vector<4x256xf32> to vector<4x255xf32>
    %46 = tpu.concatenate %44, %45 in 1 : vector<4x1xf32>, vector<4x255xf32> -> vector<4x256xf32>
    %47 = vector.extract_strided_slice %43 {offsets = [0, 1], sizes = [4, 255], strides = [1, 1]} : vector<4x256xf32> to vector<4x255xf32>
    %48 = vector.extract_strided_slice %43 {offsets = [0, 0], sizes = [4, 1], strides = [1, 1]} : vector<4x256xf32> to vector<4x1xf32>
    %49 = tpu.concatenate %47, %48 in 1 : vector<4x255xf32>, vector<4x1xf32> -> vector<4x256xf32>
    %50 = vector.shape_cast %4 : vector<1x256xi1> to vector<1x256xi1>
    %51 = vector.broadcast %50 : vector<1x256xi1> to vector<4x256xi1>
    %52 = arith.select %51, %49, %46 : vector<4x256xi1>, vector<4x256xf32>
    %53 = vector.shape_cast %6 : vector<1x256xi1> to vector<1x256xi1>
    %54 = vector.broadcast %53 : vector<1x256xi1> to vector<4x256xi1>
    %55 = arith.select %54, %46, %49 : vector<4x256xi1>, vector<4x256xf32>
    %c24 = arith.constant 24 : index
    %c0_13 = arith.constant 0 : index
    %56 = vector.load %arg6[%c24, %c0_13] : memref<36x256xf32, #tpu.memory_space<vmem>>, vector<4x256xf32>
    tpu.vector_store %arg6[%c24, %c0_13], %52 {strides = array<i32>} : memref<36x256xf32, #tpu.memory_space<vmem>>, vector<4x256xf32>,
    %c28 = arith.constant 28 : index
    %c0_14 = arith.constant 0 : index
    %57 = vector.load %arg6[%c28, %c0_14] : memref<36x256xf32, #tpu.memory_space<vmem>>, vector<4x256xf32>
    tpu.vector_store %arg6[%c28, %c0_14], %43 {strides = array<i32>} : memref<36x256xf32, #tpu.memory_space<vmem>>, vector<4x256xf32>,
    %c32 = arith.constant 32 : index
    %c0_15 = arith.constant 0 : index
    %58 = vector.load %arg6[%c32, %c0_15] : memref<36x256xf32, #tpu.memory_space<vmem>>, vector<4x256xf32>
    tpu.vector_store %arg6[%c32, %c0_15], %55 {strides = array<i32>} : memref<36x256xf32, #tpu.memory_space<vmem>>, vector<4x256xf32>,
    %c0_16 = arith.constant 0 : index
    %c0_17 = arith.constant 0 : index
    %59 = vector.load %arg6[%c0_16, %c0_17] : memref<36x256xf32, #tpu.memory_space<vmem>>, vector<36x256xf32>
    %cst = arith.constant dense<0.000000e+00> : vector<4x256xf32>
    %60 = tpu.matmul %7, %59, %cst {dimension_numbers = #tpu.dot_dimension_numbers<[1], [0], [0], [1], [0, 0, 1, 1], [], []>} : vector<4x36xf32>, vector<36x256xf32>, vector<4x256xf32> -> vector<4x256xf32>
    %cst_18 = arith.constant dense<0.000000e+00> : vector<4xf32>
    %61 = vector.multi_reduction <add>, %60, %cst_18 [1] : vector<4x256xf32> to vector<4xf32>
    %62 = vector.shape_cast %61 : vector<4xf32> to vector<4x1xf32>
    %cst_19 = arith.constant 3.906250e-03 : f32
    %63 = vector.broadcast %cst_19 : f32 to vector<4x1xf32>
    %64 = arith.mulf %62, %63 : vector<4x1xf32>
    %65 = arith.mulf %60, %60 : vector<4x256xf32>
    %cst_20 = arith.constant dense<0.000000e+00> : vector<4xf32>
    %66 = vector.multi_reduction <add>, %65, %cst_20 [1] : vector<4x256xf32> to vector<4xf32>
    %67 = vector.shape_cast %66 : vector<4xf32> to vector<4x1xf32>
    %cst_21 = arith.constant 3.906250e-03 : f32
    %68 = vector.broadcast %cst_21 : f32 to vector<4x1xf32>
    %69 = arith.mulf %67, %68 : vector<4x1xf32>
    %70 = arith.mulf %64, %64 : vector<4x1xf32>
    %71 = arith.subf %69, %70 : vector<4x1xf32>
    %cst_22 = arith.constant 0.000000e+00 : f32
    %72 = vector.broadcast %cst_22 : f32 to vector<4x1xf32>
    %73 = arith.maximumf %71, %72 : vector<4x1xf32>
    %74 = vector.broadcast %64 : vector<4x1xf32> to vector<4x256xf32>
    %75 = arith.subf %60, %74 : vector<4x256xf32>
    %cst_23 = arith.constant 9.99999974E-6 : f32
    %76 = vector.broadcast %cst_23 : f32 to vector<4x1xf32>
    %77 = arith.addf %73, %76 : vector<4x1xf32>
    %78 = math.rsqrt %77 : vector<4x1xf32>
    %79 = vector.broadcast %78 : vector<4x1xf32> to vector<4x256xf32>
    %80 = arith.mulf %75, %79 : vector<4x256xf32>
    %cst_24 = arith.constant 0.000000e+00 : f32
    %81 = vector.broadcast %cst_24 : f32 to vector<4x256xf32>
    %82 = arith.maximumf %80, %81 : vector<4x256xf32>
    %c0_25 = arith.constant 0 : index
    %c0_26 = arith.constant 0 : index
    %83 = vector.load %arg4[%c0_25, %c0_26] : memref<4x36xf32, #tpu.memory_space<vmem>>, vector<4x36xf32>
    %84 = vector.extract_strided_slice %82 {offsets = [0, 16], sizes = [4, 16], strides = [1, 1]} : vector<4x256xf32> to vector<4x16xf32>
    %85 = vector.extract_strided_slice %82 {offsets = [0, 0], sizes = [4, 240], strides = [1, 1]} : vector<4x256xf32> to vector<4x240xf32>
    %86 = tpu.concatenate %84, %85 in 1 : vector<4x16xf32>, vector<4x240xf32> -> vector<4x256xf32>
    %87 = vector.extract_strided_slice %86 {offsets = [0, 255], sizes = [4, 1], strides = [1, 1]} : vector<4x256xf32> to vector<4x1xf32>
    %88 = vector.extract_strided_slice %86 {offsets = [0, 0], sizes = [4, 255], strides = [1, 1]} : vector<4x256xf32> to vector<4x255xf32>
    %89 = tpu.concatenate %87, %88 in 1 : vector<4x1xf32>, vector<4x255xf32> -> vector<4x256xf32>
    %90 = vector.extract_strided_slice %86 {offsets = [0, 1], sizes = [4, 255], strides = [1, 1]} : vector<4x256xf32> to vector<4x255xf32>
    %91 = vector.extract_strided_slice %86 {offsets = [0, 0], sizes = [4, 1], strides = [1, 1]} : vector<4x256xf32> to vector<4x1xf32>
    %92 = tpu.concatenate %90, %91 in 1 : vector<4x255xf32>, vector<4x1xf32> -> vector<4x256xf32>
    %93 = vector.shape_cast %4 : vector<1x256xi1> to vector<1x256xi1>
    %94 = vector.broadcast %93 : vector<1x256xi1> to vector<4x256xi1>
    %95 = arith.select %94, %92, %89 : vector<4x256xi1>, vector<4x256xf32>
    %96 = vector.shape_cast %6 : vector<1x256xi1> to vector<1x256xi1>
    %97 = vector.broadcast %96 : vector<1x256xi1> to vector<4x256xi1>
    %98 = arith.select %97, %89, %92 : vector<4x256xi1>, vector<4x256xf32>
    %c0_27 = arith.constant 0 : index
    %c0_28 = arith.constant 0 : index
    %99 = vector.load %arg6[%c0_27, %c0_28] : memref<36x256xf32, #tpu.memory_space<vmem>>, vector<4x256xf32>
    tpu.vector_store %arg6[%c0_27, %c0_28], %95 {strides = array<i32>} : memref<36x256xf32, #tpu.memory_space<vmem>>, vector<4x256xf32>,
    %c4_29 = arith.constant 4 : index
    %c0_30 = arith.constant 0 : index
    %100 = vector.load %arg6[%c4_29, %c0_30] : memref<36x256xf32, #tpu.memory_space<vmem>>, vector<4x256xf32>
    tpu.vector_store %arg6[%c4_29, %c0_30], %86 {strides = array<i32>} : memref<36x256xf32, #tpu.memory_space<vmem>>, vector<4x256xf32>,
    %c8_31 = arith.constant 8 : index
    %c0_32 = arith.constant 0 : index
    %101 = vector.load %arg6[%c8_31, %c0_32] : memref<36x256xf32, #tpu.memory_space<vmem>>, vector<4x256xf32>
    tpu.vector_store %arg6[%c8_31, %c0_32], %98 {strides = array<i32>} : memref<36x256xf32, #tpu.memory_space<vmem>>, vector<4x256xf32>,
    %102 = vector.extract_strided_slice %82 {offsets = [0, 255], sizes = [4, 1], strides = [1, 1]} : vector<4x256xf32> to vector<4x1xf32>
    %103 = vector.extract_strided_slice %82 {offsets = [0, 0], sizes = [4, 255], strides = [1, 1]} : vector<4x256xf32> to vector<4x255xf32>
    %104 = tpu.concatenate %102, %103 in 1 : vector<4x1xf32>, vector<4x255xf32> -> vector<4x256xf32>
    %105 = vector.extract_strided_slice %82 {offsets = [0, 1], sizes = [4, 255], strides = [1, 1]} : vector<4x256xf32> to vector<4x255xf32>
    %106 = vector.extract_strided_slice %82 {offsets = [0, 0], sizes = [4, 1], strides = [1, 1]} : vector<4x256xf32> to vector<4x1xf32>
    %107 = tpu.concatenate %105, %106 in 1 : vector<4x255xf32>, vector<4x1xf32> -> vector<4x256xf32>
    %108 = vector.shape_cast %4 : vector<1x256xi1> to vector<1x256xi1>
    %109 = vector.broadcast %108 : vector<1x256xi1> to vector<4x256xi1>
    %110 = arith.select %109, %107, %104 : vector<4x256xi1>, vector<4x256xf32>
    %111 = vector.shape_cast %6 : vector<1x256xi1> to vector<1x256xi1>
    %112 = vector.broadcast %111 : vector<1x256xi1> to vector<4x256xi1>
    %113 = arith.select %112, %104, %107 : vector<4x256xi1>, vector<4x256xf32>
    %c12_33 = arith.constant 12 : index
    %c0_34 = arith.constant 0 : index
    %114 = vector.load %arg6[%c12_33, %c0_34] : memref<36x256xf32, #tpu.memory_space<vmem>>, vector<4x256xf32>
    tpu.vector_store %arg6[%c12_33, %c0_34], %110 {strides = array<i32>} : memref<36x256xf32, #tpu.memory_space<vmem>>, vector<4x256xf32>,
    %c16_35 = arith.constant 16 : index
    %c0_36 = arith.constant 0 : index
    %115 = vector.load %arg6[%c16_35, %c0_36] : memref<36x256xf32, #tpu.memory_space<vmem>>, vector<4x256xf32>
    tpu.vector_store %arg6[%c16_35, %c0_36], %82 {strides = array<i32>} : memref<36x256xf32, #tpu.memory_space<vmem>>, vector<4x256xf32>,
    %c20_37 = arith.constant 20 : index
    %c0_38 = arith.constant 0 : index
    %116 = vector.load %arg6[%c20_37, %c0_38] : memref<36x256xf32, #tpu.memory_space<vmem>>, vector<4x256xf32>
    tpu.vector_store %arg6[%c20_37, %c0_38], %113 {strides = array<i32>} : memref<36x256xf32, #tpu.memory_space<vmem>>, vector<4x256xf32>,
    %117 = vector.extract_strided_slice %82 {offsets = [0, 16], sizes = [4, 240], strides = [1, 1]} : vector<4x256xf32> to vector<4x240xf32>
    %118 = vector.extract_strided_slice %82 {offsets = [0, 224], sizes = [4, 16], strides = [1, 1]} : vector<4x256xf32> to vector<4x16xf32>
    %119 = tpu.concatenate %117, %118 in 1 : vector<4x240xf32>, vector<4x16xf32> -> vector<4x256xf32>
    %120 = vector.extract_strided_slice %119 {offsets = [0, 255], sizes = [4, 1], strides = [1, 1]} : vector<4x256xf32> to vector<4x1xf32>
    %121 = vector.extract_strided_slice %119 {offsets = [0, 0], sizes = [4, 255], strides = [1, 1]} : vector<4x256xf32> to vector<4x255xf32>
    %122 = tpu.concatenate %120, %121 in 1 : vector<4x1xf32>, vector<4x255xf32> -> vector<4x256xf32>
    %123 = vector.extract_strided_slice %119 {offsets = [0, 1], sizes = [4, 255], strides = [1, 1]} : vector<4x256xf32> to vector<4x255xf32>
    %124 = vector.extract_strided_slice %119 {offsets = [0, 0], sizes = [4, 1], strides = [1, 1]} : vector<4x256xf32> to vector<4x1xf32>
    %125 = tpu.concatenate %123, %124 in 1 : vector<4x255xf32>, vector<4x1xf32> -> vector<4x256xf32>
    %126 = vector.shape_cast %4 : vector<1x256xi1> to vector<1x256xi1>
    %127 = vector.broadcast %126 : vector<1x256xi1> to vector<4x256xi1>
    %128 = arith.select %127, %125, %122 : vector<4x256xi1>, vector<4x256xf32>
    %129 = vector.shape_cast %6 : vector<1x256xi1> to vector<1x256xi1>
    %130 = vector.broadcast %129 : vector<1x256xi1> to vector<4x256xi1>
    %131 = arith.select %130, %122, %125 : vector<4x256xi1>, vector<4x256xf32>
    %c24_39 = arith.constant 24 : index
    %c0_40 = arith.constant 0 : index
    %132 = vector.load %arg6[%c24_39, %c0_40] : memref<36x256xf32, #tpu.memory_space<vmem>>, vector<4x256xf32>
    tpu.vector_store %arg6[%c24_39, %c0_40], %128 {strides = array<i32>} : memref<36x256xf32, #tpu.memory_space<vmem>>, vector<4x256xf32>,
    %c28_41 = arith.constant 28 : index
    %c0_42 = arith.constant 0 : index
    %133 = vector.load %arg6[%c28_41, %c0_42] : memref<36x256xf32, #tpu.memory_space<vmem>>, vector<4x256xf32>
    tpu.vector_store %arg6[%c28_41, %c0_42], %119 {strides = array<i32>} : memref<36x256xf32, #tpu.memory_space<vmem>>, vector<4x256xf32>,
    %c32_43 = arith.constant 32 : index
    %c0_44 = arith.constant 0 : index
    %134 = vector.load %arg6[%c32_43, %c0_44] : memref<36x256xf32, #tpu.memory_space<vmem>>, vector<4x256xf32>
    tpu.vector_store %arg6[%c32_43, %c0_44], %131 {strides = array<i32>} : memref<36x256xf32, #tpu.memory_space<vmem>>, vector<4x256xf32>,
    %c0_45 = arith.constant 0 : index
    %c0_46 = arith.constant 0 : index
    %135 = vector.load %arg6[%c0_45, %c0_46] : memref<36x256xf32, #tpu.memory_space<vmem>>, vector<36x256xf32>
    %cst_47 = arith.constant dense<0.000000e+00> : vector<4x256xf32>
    %136 = tpu.matmul %83, %135, %cst_47 {dimension_numbers = #tpu.dot_dimension_numbers<[1], [0], [0], [1], [0, 0, 1, 1], [], []>} : vector<4x36xf32>, vector<36x256xf32>, vector<4x256xf32> -> vector<4x256xf32>
    %cst_48 = arith.constant dense<0.000000e+00> : vector<4xf32>
    %137 = vector.multi_reduction <add>, %136, %cst_48 [1] : vector<4x256xf32> to vector<4xf32>
    %138 = vector.shape_cast %137 : vector<4xf32> to vector<4x1xf32>
    %cst_49 = arith.constant 3.906250e-03 : f32
    %139 = vector.broadcast %cst_49 : f32 to vector<4x1xf32>
    %140 = arith.mulf %138, %139 : vector<4x1xf32>
    %141 = arith.mulf %136, %136 : vector<4x256xf32>
    %cst_50 = arith.constant dense<0.000000e+00> : vector<4xf32>
    %142 = vector.multi_reduction <add>, %141, %cst_50 [1] : vector<4x256xf32> to vector<4xf32>
    %143 = vector.shape_cast %142 : vector<4xf32> to vector<4x1xf32>
    %cst_51 = arith.constant 3.906250e-03 : f32
    %144 = vector.broadcast %cst_51 : f32 to vector<4x1xf32>
    %145 = arith.mulf %143, %144 : vector<4x1xf32>
    %146 = arith.mulf %140, %140 : vector<4x1xf32>
    %147 = arith.subf %145, %146 : vector<4x1xf32>
    %cst_52 = arith.constant 0.000000e+00 : f32
    %148 = vector.broadcast %cst_52 : f32 to vector<4x1xf32>
    %149 = arith.maximumf %147, %148 : vector<4x1xf32>
    %150 = vector.broadcast %140 : vector<4x1xf32> to vector<4x256xf32>
    %151 = arith.subf %136, %150 : vector<4x256xf32>
    %cst_53 = arith.constant 9.99999974E-6 : f32
    %152 = vector.broadcast %cst_53 : f32 to vector<4x1xf32>
    %153 = arith.addf %149, %152 : vector<4x1xf32>
    %154 = math.rsqrt %153 : vector<4x1xf32>
    %155 = vector.broadcast %154 : vector<4x1xf32> to vector<4x256xf32>
    %156 = arith.mulf %151, %155 : vector<4x256xf32>
    %157 = arith.addf %1, %156 : vector<4x256xf32>
    %c0_54 = arith.constant 0 : index
    %c0_55 = arith.constant 0 : index
    %c0_56 = arith.constant 0 : index
    %158 = vector.load %arg5[%c0_54, %c0_55, %c0_56] : memref<1x4x256xf32, #tpu.memory_space<vmem>>, vector<1x4x256xf32>
    %159 = vector.shape_cast %158 : vector<1x4x256xf32> to vector<4x256xf32>
    %160 = vector.shape_cast %157 : vector<4x256xf32> to vector<1x4x256xf32>
    tpu.vector_store %arg5[%c0_54, %c0_55, %c0_56], %160 {strides = array<i32>} : memref<1x4x256xf32, #tpu.memory_space<vmem>>, vector<1x4x256xf32>,
    return
  }
  func.func @transform_0(%arg0: i32) -> (i32, i32, i32) {
    %c0_i32 = arith.constant 0 : i32
    %c0_i32_0 = arith.constant 0 : i32
    %c0_i32_1 = arith.constant 0 : i32
    return %arg0, %c0_i32, %c0_i32_0 : i32, i32, i32
  }
  func.func @transform_1(%arg0: i32) -> (i32, i32) {
    %c0_i32 = arith.constant 0 : i32
    %c0_i32_0 = arith.constant 0 : i32
    %c0_i32_1 = arith.constant 0 : i32
    return %c0_i32, %c0_i32_0 : i32, i32
  }
  func.func @transform_2(%arg0: i32) -> (i32, i32) {
    %c0_i32 = arith.constant 0 : i32
    %c0_i32_0 = arith.constant 0 : i32
    %c0_i32_1 = arith.constant 0 : i32
    return %c0_i32, %c0_i32_0 : i32, i32
  }
  func.func @transform_3(%arg0: i32) -> (i32, i32) {
    %c0_i32 = arith.constant 0 : i32
    %c0_i32_0 = arith.constant 0 : i32
    %c0_i32_1 = arith.constant 0 : i32
    return %c0_i32, %c0_i32_0 : i32, i32
  }
  func.func @transform_4(%arg0: i32) -> (i32, i32, i32) {
    %c0_i32 = arith.constant 0 : i32
    %c0_i32_0 = arith.constant 0 : i32
    %c0_i32_1 = arith.constant 0 : i32
    return %arg0, %c0_i32, %c0_i32_0 : i32, i32, i32
  }
}

</mosaic_0001>

<llo_original>
// kernel: resnet_block_forward.1
$region0: #{resnet_block_forward.1}
  #allocation0 [shape = 'u32[]', space=smem, size = 0x4, offset = 0x4, fixed_abs, tag = 'smem constant byte address 0x4 - core index']
  #allocation1 [shape = 'u32[144,128]{1,0:T(1,128)}', space=vmem, size = 0x12000, scoped, tag = 'internal scratch']
  #allocation2 [shape = 'f32[36,256]{1,0:T(8,128)}', space=vmem, size = 0xa000, scoped, tag = 'scratch operand']
  %s0 = inlined_call_operand.vmem [shape: f32[2,4,256], index: 0, kind: input, shape index: {}]
  %s1 = inlined_call_operand.vmem [shape: s32[1,256], index: 1, kind: input, shape index: {}]
  %s2 = inlined_call_operand.vmem [shape: f32[4,36], index: 2, kind: input, shape index: {}]
  %s3 = inlined_call_operand.vmem [shape: f32[4,36], index: 3, kind: input, shape index: {}]
  %s4 = inlined_call_operand.vmem [shape: f32[2,4,256], index: 4, kind: output, shape index: {}]
  %s5 = sld [smem:[#allocation0]]
  $region49: #{resnet_block_forward.1} parent=0
    _
  %s7 = ssub.s32 1, %s5
  %s8 = scalar_select 0, %s7, %s5
  loop: start=0, step=1, limit=4
  $region2: #{resnet_block_forward.1} parent=0 // loop_pre_header
    _
  $region3: #{resnet_block_forward.1} parent=0 // loop_header
    %s10 = sphi 0, %s14
    %p11 = scmp.ge.s32.totalorder %s10, 4
    %s20 = sphi 0, %s22
    %s23 = sphi 0, %s20
    %s24 = sphi 0, %s23
    %s40 = sphi 0, %s24
    %s44 = sphi 0, %s44
    %s46 = sphi 0, %s44
    %s47 = sphi 0, %s46
    %s61 = sphi 0, %s47
    %s65 = sphi 0, %s65
    %s67 = sphi 0, %s65
    %s68 = sphi 0, %s67
    %s82 = sphi 0, %s68
    %s86 = sphi 0, %s86
    %s88 = sphi 0, %s86
    %s89 = sphi 0, %s88
    %s103 = sphi 0, %s89
    %s109 = sphi 0, %s111
    %s112 = sphi 0, %s109
    %s113 = sphi 0, %s112
    %s129 = sphi 0, %s113
  $region4: #{resnet_block_forward.1} parent=0 // loop_header_branch
    %13 = sbr.rel (%p11) target = $region8
  $region5: #{resnet_block_forward.1} parent=0 // loop_body
    %s15 = ssub.s32 %s10, 1
    %s16 = ssub.s32 %s10, 2
    %s17 = sadd.s32 %s10, 1
    %s18 = ssub.s32 %s10, %s17
    %p19 = scmp.eq.s32.totalorder %s18, 0
    %s21 = sadd.s32 %s20, 1
    %s22 = scalar_select %p19, %s20, %s21
    %p25 = pneg %p19
    %p26 = scmp.eq.s32.totalorder %s10, 1
    %p27 = por %p25, %p26
    %p28 = scmp.ne.s32.totalorder %s20, %s23
    %p29 = scmp.eq.s32.totalorder %s10, 0
    %p30 = por %p28, %p29
    %p31 = scmp.ne.s32.totalorder %s20, %s23
    %p32 = scmp.eq.s32.totalorder %s15, 1
    %p33 = por %p31, %p32
    %p34 = scmp.ne.s32.totalorder %s23, %s24
    %p35 = scmp.eq.s32.totalorder %s15, 0
    %p36 = por %p34, %p35
    %p37 = scmp.ne.s32.totalorder %s23, %s24
    %p38 = scmp.eq.s32.totalorder %s16, 1
    %p39 = por %p37, %p38
    %p41 = scmp.ne.s32.totalorder %s24, %s40
    %p42 = scmp.eq.s32.totalorder %s16, 0
    %p43 = por %p41, %p42
    %s45 = sadd.s32 %s44, 1
    %p48 = scmp.eq.s32.totalorder %s10, 1
    %p49 = scmp.ne.s32.totalorder %s44, %s46
    %p50 = scmp.eq.s32.totalorder %s10, 0
    %p51 = por %p49, %p50
    %p52 = scmp.ne.s32.totalorder %s44, %s46
    %p53 = scmp.eq.s32.totalorder %s15, 1
    %p54 = por %p52, %p53
    %p55 = scmp.ne.s32.totalorder %s46, %s47
    %p56 = scmp.eq.s32.totalorder %s15, 0
    %p57 = por %p55, %p56
    %p58 = scmp.ne.s32.totalorder %s46, %s47
    %p59 = scmp.eq.s32.totalorder %s16, 1
    %p60 = por %p58, %p59
    %p62 = scmp.ne.s32.totalorder %s47, %s61
    %p63 = scmp.eq.s32.totalorder %s16, 0
    %p64 = por %p62, %p63
    %s66 = sadd.s32 %s65, 1
    %p69 = scmp.eq.s32.totalorder %s10, 1
    %p70 = scmp.ne.s32.totalorder %s65, %s67
    %p71 = scmp.eq.s32.totalorder %s10, 0
    %p72 = por %p70, %p71
    %p73 = scmp.ne.s32.totalorder %s65, %s67
    %p74 = scmp.eq.s32.totalorder %s15, 1
    %p75 = por %p73, %p74
    %p76 = scmp.ne.s32.totalorder %s67, %s68
    %p77 = scmp.eq.s32.totalorder %s15, 0
    %p78 = por %p76, %p77
    %p79 = scmp.ne.s32.totalorder %s67, %s68
    %p80 = scmp.eq.s32.totalorder %s16, 1
    %p81 = por %p79, %p80
    %p83 = scmp.ne.s32.totalorder %s68, %s82
    %p84 = scmp.eq.s32.totalorder %s16, 0
    %p85 = por %p83, %p84
    %s87 = sadd.s32 %s86, 1
    %p90 = scmp.eq.s32.totalorder %s10, 1
    %p91 = scmp.ne.s32.totalorder %s86, %s88
    %p92 = scmp.eq.s32.totalorder %s10, 0
    %p93 = por %p91, %p92
    %p94 = scmp.ne.s32.totalorder %s86, %s88
    %p95 = scmp.eq.s32.totalorder %s15, 1
    %p96 = por %p94, %p95
    %p97 = scmp.ne.s32.totalorder %s88, %s89
    %p98 = scmp.eq.s32.totalorder %s15, 0
    %p99 = por %p97, %p98
    %p100 = scmp.ne.s32.totalorder %s88, %s89
    %p101 = scmp.eq.s32.totalorder %s16, 1
    %p102 = por %p100, %p101
    %p104 = scmp.ne.s32.totalorder %s89, %s103
    %p105 = scmp.eq.s32.totalorder %s16, 0
    %p106 = por %p104, %p105
    %s107 = ssub.s32 %s10, %s17
    %p108 = scmp.eq.s32.totalorder %s107, 0
    %s110 = sadd.s32 %s109, 1
    %s111 = scalar_select %p108, %s109, %s110
    %p114 = pneg %p108
    %p115 = scmp.eq.s32.totalorder %s10, 1
    %p116 = por %p114, %p115
    %p117 = scmp.ne.s32.totalorder %s109, %s112
    %p118 = scmp.eq.s32.totalorder %s10, 0
    %p119 = por %p117, %p118
    %p120 = scmp.ne.s32.totalorder %s109, %s112
    %p121 = scmp.eq.s32.totalorder %s15, 1
    %p122 = por %p120, %p121
    %p123 = scmp.ne.s32.totalorder %s112, %s113
    %p124 = scmp.eq.s32.totalorder %s15, 0
    %p125 = por %p123, %p124
    %p126 = scmp.ne.s32.totalorder %s112, %s113
    %p127 = scmp.eq.s32.totalorder %s16, 1
    %p128 = por %p126, %p127
    %p130 = scmp.ne.s32.totalorder %s113, %s129
    %p131 = scmp.eq.s32.totalorder %s16, 0
    %p132 = por %p130, %p131
    %p133 = scmp.le.s32.totalorder 1, %s10
    %p134 = scmp.lt.s32.totalorder %s10, 3
    %p135 = pnand %p133, %p134
    %p136 = pneg %p135
    // Predicated region
    $region9: #{resnet_block_forward.1} parent=5 // pred_check
      _
    $region10: #{resnet_block_forward.1} parent=5 // pred_check_branch
      %138 = sbr.rel (%p135) target = $region12
    $region11: #{resnet_block_forward.1} parent=5 // pred_region
      %s139 = ssub.s32 %s10, 1
      // Predicated region
      $region13: #{resnet_block_forward.1} parent=11 // pred_check
        %p140 = pneg %p57
      $region14: #{resnet_block_forward.1} parent=11 // pred_check_branch
        %142 = sbr.rel (%p140) target = $region16
      $region15: #{resnet_block_forward.1} parent=11 // pred_region
        _
      $region16: #{resnet_block_forward.1} parent=11 // pred_fallthru
        _
      // Predicated region
      $region17: #{resnet_block_forward.1} parent=11 // pred_check
        %p143 = pneg %p78
      $region18: #{resnet_block_forward.1} parent=11 // pred_check_branch
        %145 = sbr.rel (%p143) target = $region20
      $region19: #{resnet_block_forward.1} parent=11 // pred_region
        _
      $region20: #{resnet_block_forward.1} parent=11 // pred_fallthru
        _
      // Predicated region
      $region21: #{resnet_block_forward.1} parent=11 // pred_check
        %p146 = pneg %p99
      $region22: #{resnet_block_forward.1} parent=11 // pred_check_branch
        %148 = sbr.rel (%p146) target = $region24
      $region23: #{resnet_block_forward.1} parent=11 // pred_region
        _
      $region24: #{resnet_block_forward.1} parent=11 // pred_fallthru
        _
    $region12: #{resnet_block_forward.1} parent=5 // pred_fallthru
      _
    %p149 = scmp.lt.s32.totalorder %s10, 2
    // Predicated region
    $region25: #{resnet_block_forward.1} parent=5 // pred_check
      %p150 = pneg %p149
    $region26: #{resnet_block_forward.1} parent=5 // pred_check_branch
      %152 = sbr.rel (%p150) target = $region28
    $region27: #{resnet_block_forward.1} parent=5 // pred_region
      // Predicated region
      $region29: #{resnet_block_forward.1} parent=27 // pred_check
        %p153 = pneg %p30
      $region30: #{resnet_block_forward.1} parent=27 // pred_check_branch
        %155 = sbr.rel (%p153) target = $region32
      $region31: #{resnet_block_forward.1} parent=27 // pred_region
        %p156 = scmp.lt.s32.totalorder %s10, 1
        %s157 = scalar_select %p156, %s10, 1
        %s158 = smul.addr %s157, 2
        %s159 = smul.addr %s158, 4
        %s160 = scalar_lea.vmem %s0, %s159
      $region32: #{resnet_block_forward.1} parent=27 // pred_fallthru
        _
    $region28: #{resnet_block_forward.1} parent=5 // pred_fallthru
      _
    %p161 = scmp.le.s32.totalorder 1, %s10
    %p162 = scmp.lt.s32.totalorder %s10, 3
    %p163 = pnand %p161, %p162
    %p164 = pneg %p163
    // Predicated region
    $region33: #{resnet_block_forward.1} parent=5 // pred_check
      _
    $region34: #{resnet_block_forward.1} parent=5 // pred_check_branch
      %166 = sbr.rel (%p163) target = $region36
    $region35: #{resnet_block_forward.1} parent=5 // pred_region
      %s167 = ssub.s32 %s10, 1
      %p168 = scmp.lt.s32.totalorder %s15, 1
      %s169 = scalar_select %p168, %s15, 1
      %s170 = smul.addr %s169, 2
      %s171 = smul.addr %s170, 4
      %s172 = scalar_lea.vmem %s0, %s171
      %p173 = pneg %p36
      %p174 = pneg %p33
      %p175 = pneg %p57
      %p176 = pneg %p54
      %p177 = pneg %p78
      %p178 = pneg %p75
      %p179 = pneg %p99
      %p180 = pneg %p96
      %p181 = pneg %p125
      %p182 = pneg %p122
      %p183 = scmp.lt.s32.totalorder %s15, 1
      %s184 = scalar_select %p183, %s15, 1
      %s185 = smul.addr %s184, 2
      %s186 = smul.addr %s185, 4
      %s187 = scalar_lea.vmem %s4, %s186
      %p188 = scmp.lt.s32.totalorder %s15, 1
      %s189 = scalar_select %p188, %s15, 1
      %s190 = smul.addr %s189, 2
      %s191 = smul.addr %s190, 4
      %s192 = scalar_lea.vmem %s0, %s191
      %p193 = scmp.lt.s32.totalorder %s15, 1
      %s194 = scalar_select %p193, %s15, 1
      %s195 = smul.addr %s194, 2
      %s196 = smul.addr %s195, 4
      %s197 = scalar_lea.vmem %s4, %s196
      %v198 = vld [vmem:[%s192] sm:$0xff]
      %v199 = vld [vmem:[%s1] sm:$0x3]
      %vm200 = vcmp.eq.s32.totalorder %v199, 0
      %vm201 = vcmp.eq.s32.totalorder %v199, 15
      %v202 = vld [vmem:[%s2] sm:$0xf]
      %204 = vrot.lane.b32.xlu0 %v198, 112
      %v205 = vpop.permute.xlu0 %204
      %v207 = vcombine.high %v198, %v198
      %208 = vrot.lane.b32.xlu0 %v198, 16
      %v209 = vpop.permute.xlu0 %208
      %210 = vrot.lane.b32.xlu0 %v207, 16
      %v211 = vpop.permute.xlu0 %210
      %vm212 = vcmask 130048
      %v213 = vsel %vm212, %v209, %v211
      %v215 = vsel %vm212, %v205, %v209
      %216 = vrot.lane.b32.xlu0 %v213, 1
      %v217 = vpop.permute.xlu0 %216
      %220 = vrot.lane.b32.xlu0 %v215, 1
      %v221 = vpop.permute.xlu0 %220
      %vm222 = vcmask 7168
      %v223 = vsel %vm222, %v221, %v217
      %v226 = vsel %vm222, %v217, %v221
      %227 = vrot.lane.b32.xlu0 %v215, 127
      %v228 = vpop.permute.xlu0 %227
      %229 = vrot.lane.b32.xlu0 %v213, 127
      %v230 = vpop.permute.xlu0 %229
      %vm231 = vcmask 1039360
      %v232 = vsel %vm231, %v228, %v230
      %v236 = vsel %vm231, %v230, %v228
      %v237 = vsel %vm200, 1, 0
      %v238 = vlaneseq
      %v239 = vshrl.u32 %v238, 7
      %v240 = vsub.s32 0, %v239
      %v241 = vrot.slane %v237, %v240
      %v242 = vlaneseq
      %v243 = vshrl.u32 %v242, 7
      %v244 = vsub.s32 1, %v243
      %v245 = vrot.slane %v237, %v244
      %vm246 = vcmp.eq.s32.totalorder %v241, 1
      %vm247 = vcmp.eq.s32.totalorder %v245, 1
      %v248 = vsel %vm246, %v232, %v226
      %v249 = vsel %vm247, %v236, %v223
      %v250 = vsel %vm201, 1, 0
      %v251 = vlaneseq
      %v252 = vshrl.u32 %v251, 7
      %v253 = vsub.s32 0, %v252
      %v254 = vrot.slane %v250, %v253
      %v255 = vlaneseq
      %v256 = vshrl.u32 %v255, 7
      %v257 = vsub.s32 1, %v256
      %v258 = vrot.slane %v250, %v257
      %vm259 = vcmp.eq.s32.totalorder %v254, 1
      %vm260 = vcmp.eq.s32.totalorder %v258, 1
      %v261 = vsel %vm259, %v226, %v232
      %v262 = vsel %vm260, %v223, %v236
      %263 = vst [vmem:[#allocation2] sm:$0xf] %v248
      %264 = vst [vmem:[#allocation2 + $0x8] sm:$0xf] %v249
      %v265 = vrot.slane %v215, 4
      %v266 = vrot.slane %v213, 4
      %269 = vst [vmem:[#allocation2] sm:$0xf0] %v265
      %270 = vst [vmem:[#allocation2 + $0x8] sm:$0xf0] %v266
      %271 = vst [vmem:[#allocation2 + $0x10] sm:$0xf] %v261
      %272 = vst [vmem:[#allocation2 + $0x18] sm:$0xf] %v262
      %273 = vrot.lane.b32.xlu0 %v207, 1
      %v274 = vpop.permute.xlu0 %273
      %276 = vrot.lane.b32.xlu0 %v198, 1
      %v277 = vpop.permute.xlu0 %276
      %v278 = vsel %vm222, %v277, %v274
      %v281 = vsel %vm222, %v274, %v277
      %282 = vrot.lane.b32.xlu0 %v198, 127
      %v283 = vpop.permute.xlu0 %282
      %284 = vrot.lane.b32.xlu0 %v207, 127
      %v285 = vpop.permute.xlu0 %284
      %v286 = vsel %vm231, %v283, %v285
      %v290 = vsel %vm231, %v285, %v283
      %v291 = vsel %vm246, %v286, %v281
      %v292 = vsel %vm247, %v290, %v278
      %v293 = vsel %vm259, %v281, %v286
      %v294 = vsel %vm260, %v278, %v290
      %v297 = vrot.slane %v291, 4
      %v298 = vrot.slane %v292, 4
      %301 = vst [vmem:[#allocation2 + $0x10] sm:$0xf0] %v297
      %302 = vst [vmem:[#allocation2 + $0x18] sm:$0xf0] %v298
      %304 = vst [vmem:[#allocation2 + $0x20] sm:$0xf] %v198
      %305 = vst [vmem:[#allocation2 + $0x28] sm:$0xf] %v207
      %v308 = vrot.slane %v293, 4
      %v309 = vrot.slane %v294, 4
      %312 = vst [vmem:[#allocation2 + $0x20] sm:$0xf0] %v308
      %313 = vst [vmem:[#allocation2 + $0x28] sm:$0xf0] %v309
      %314 = vrot.lane.b32.xlu0 %v207, 112
      %v315 = vpop.permute.xlu0 %314
      %vm316 = vcmask 916480
      %v317 = vsel %vm316, %v205, %v315
      %v320 = vsel %vm316, %v315, %v211
      %322 = vrot.lane.b32.xlu0 %v320, 1
      %v323 = vpop.permute.xlu0 %322
      %325 = vrot.lane.b32.xlu0 %v317, 1
      %v326 = vpop.permute.xlu0 %325
      %v327 = vsel %vm222, %v326, %v323
      %v330 = vsel %vm222, %v323, %v326
      %331 = vrot.lane.b32.xlu0 %v317, 127
      %v332 = vpop.permute.xlu0 %331
      %333 = vrot.lane.b32.xlu0 %v320, 127
      %v334 = vpop.permute.xlu0 %333
      %v335 = vsel %vm231, %v332, %v334
      %v339 = vsel %vm231, %v334, %v332
      %v340 = vsel %vm246, %v335, %v330
      %v341 = vsel %vm247, %v339, %v327
      %v342 = vsel %vm259, %v330, %v335
      %v343 = vsel %vm260, %v327, %v339
      %344 = vst [vmem:[#allocation2 + $0x30] sm:$0xf] %v340
      %345 = vst [vmem:[#allocation2 + $0x38] sm:$0xf] %v341
      %v346 = vrot.slane %v317, 4
      %v347 = vrot.slane %v320, 4
      %350 = vst [vmem:[#allocation2 + $0x30] sm:$0xf0] %v346
      %351 = vst [vmem:[#allocation2 + $0x38] sm:$0xf0] %v347
      %352 = vst [vmem:[#allocation2 + $0x40] sm:$0xf] %v342
      %353 = vst [vmem:[#allocation2 + $0x48] sm:$0xf] %v343
      %v354 = vld [vmem:[#allocation2] sm:$0xff]
      %v355 = vld [vmem:[#allocation2 + $0x8] sm:$0xff]
      %v356 = vld [vmem:[#allocation2 + $0x10] sm:$0xff]
      %v357 = vld [vmem:[#allocation2 + $0x18] sm:$0xff]
      %v358 = vld [vmem:[#allocation2 + $0x20] sm:$0xff]
      %v359 = vld [vmem:[#allocation2 + $0x28] sm:$0xff]
      %v360 = vld [vmem:[#allocation2 + $0x30] sm:$0xff]
      %v361 = vld [vmem:[#allocation2 + $0x38] sm:$0xff]
      %v362 = vld [vmem:[#allocation2 + $0x40] sm:$0xf]
      %v363 = vld [vmem:[#allocation2 + $0x48] sm:$0xf]
      %vm364 = vcmask 293888
      %v366 = vsel %vm364, %v202, 0
      %vm368 = vcmask 1043456
      %v370 = vsel %vm368, %v362, 0
      %v373 = vsel %vm368, %v363, 0
      %375 = vmatprep.subr.mxu0 %v355
      %376 = vmatpush1.msra.mxu0 %v354
      %377 = vmatprep.subr.mxu0 %v357
      %378 = vmatpush1.msra.mxu0 %v356
      %379 = vmatprep.subr.mxu0 %v359
      %380 = vmatpush1.msra.mxu0 %v358
      %381 = vmatprep.subr.mxu0 %v361
      %382 = vmatpush1.msra.mxu0 %v360
      %383 = vmatprep.subr.mxu0 %v373
      %384 = vmatpush1.msra.mxu0 %v370
      %385 = vmatprep.subr.mxu0 0.0
      %386 = vmatpush1.msra.mxu0 0.0
      %387 = vmatprep.subr.mxu0 0.0
      %388 = vmatpush1.msra.mxu0 0.0
      %389 = vmatprep.subr.mxu0 0.0
      %390 = vmatpush1.msra.mxu0 0.0
      %391 = vmatprep.subr.mxu0 0.0
      %392 = vmatpush1.msra.mxu0 0.0
      %393 = vmatprep.subr.mxu0 0.0
      %394 = vmatpush1.msra.mxu0 0.0
      %395 = vmatprep.subr.mxu0 0.0
      %396 = vmatpush1.msra.mxu0 0.0
      %397 = vmatprep.subr.mxu0 0.0
      %398 = vmatpush1.msra.mxu0 0.0
      %399 = vmatprep.subr.mxu0 0.0
      %400 = vmatpush1.msra.mxu0 0.0
      %401 = vmatprep.subr.mxu0 0.0
      %402 = vmatpush1.msra.mxu0 0.0
      %403 = vmatprep.subr.mxu0 0.0
      %404 = vmatpush1.msra.mxu0 0.0
      %405 = vmatprep.subr.mxu0 0.0
      %406 = vmatpush1.msra.mxu0 0.0
      %407 = vmatprep.subr.mxu0 0.0
      %408 = vmatpush1.msra.mxu0 0.0
      %409 = vmatprep.subr.mxu0 0.0
      %410 = vmatpush1.msra.mxu0 0.0
      %411 = vmatprep.subr.mxu0 0.0
      %412 = vmatpush1.msra.mxu0 0.0
      %413 = vmatprep.subr.mxu0 0.0
      %414 = vmatpush1.msra.mxu0 0.0
      %415 = vmatprep.subr.mxu0 0.0
      %416 = vmatpush1.msra.mxu0 0.0
      %417 = vmatprep.subr.mxu0 0.0
      %418 = vmatpush1.msra.mxu0 0.0
      %419 = vmatprep.subr.mxu0 0.0
      %420 = vmatpush1.msra.mxu0 0.0
      %421 = vmatprep.subr.mxu0 0.0
      %422 = vmatpush1.msra.mxu0 0.0
      %423 = vmatprep.subr.mxu0 0.0
      %424 = vmatpush1.msra.mxu0 0.0
      %425 = vmatprep.subr.mxu0 0.0
      %426 = vmatpush1.msra.mxu0 0.0
      %427 = vmatprep.subr.mxu0 0.0
      %428 = vmatpush1.msra.mxu0 0.0
      %429 = vmatprep.subr.mxu0 0.0
      %430 = vmatpush1.msra.mxu0 0.0
      %431 = vmatprep.subr.mxu0 0.0
      %432 = vmatpush1.msra.mxu0 0.0
      %433 = vmatprep.subr.mxu0 0.0
      %434 = vmatpush1.msra.mxu0 0.0
      %435 = vmatprep.subr.mxu0 0.0
      %436 = vmatpush1.msra.mxu0 0.0
      %437 = vmatprep.subr.mxu0 0.0
      %438 = vmatpush1.msra.mxu0 0.0
      %439 = vmatprep.mubr.f32.mxu0 0.0
      %440 = vmatmul.mubr.f32.gmra.mrb[0].mxu0 %v366
      %v441 = vpop.f32.mrb[0].mxu0
      %v442 = vadd.f32 0.0, %v441
      %v443 = vpop.f32.mrb[0].mxu0
      %v444 = vadd.f32 0.0, %v443
      %445 = vdwg.mxu0
      %v446 = vsel %vm368, %v442, 0.0
      %v447 = vsel %vm368, %v444, 0.0
      %v448 = vadd.f32 %v446, %v447
      %449 = vadd.xlane.f32.xlu0 %v448
      %v450 = vpop.xlane.xlu0 %449
      %v451 = vmul.f32 %v450, 0.00390625
      %v452 = vmul.f32 %v442, %v442
      %v453 = vmul.f32 %v444, %v444
      %v454 = vsel %vm368, %v452, 0.0
      %v455 = vsel %vm368, %v453, 0.0
      %v456 = vadd.f32 %v454, %v455
      %457 = vadd.xlane.f32.xlu0 %v456
      %v458 = vpop.xlane.xlu0 %457
      %v459 = vmul.f32 %v458, 0.00390625
      %v460 = vmul.f32 %v451, %v451
      %v461 = vsub.f32 %v459, %v460
      %v462 = vmax.f32 %v461, 0.0
      %v463 = vsub.f32 %v442, %v451
      %v464 = vsub.f32 %v444, %v451
      %v465 = vadd.f32 %v462, 1e-05
      %v466 = vrsqrt.pop %v465
      %v467 = vmul.f32 %v463, %v466
      %v468 = vmul.f32 %v464, %v466
      %v469 = vmax.f32 %v467, 0.0
      %v470 = vmax.f32 %v468, 0.0
      %v471 = vld [vmem:[%s3] sm:$0xf]
      %473 = vrot.lane.b32.xlu0 %v469, 112
      %v474 = vpop.permute.xlu0 %473
      %477 = vrot.lane.b32.xlu0 %v469, 16
      %v478 = vpop.permute.xlu0 %477
      %479 = vrot.lane.b32.xlu0 %v470, 16
      %v480 = vpop.permute.xlu0 %479
      %v481 = vsel %vm212, %v478, %v480
      %v483 = vsel %vm212, %v474, %v478
      %484 = vrot.lane.b32.xlu0 %v481, 1
      %v485 = vpop.permute.xlu0 %484
      %488 = vrot.lane.b32.xlu0 %v483, 1
      %v489 = vpop.permute.xlu0 %488
      %v490 = vsel %vm222, %v489, %v485
      %v493 = vsel %vm222, %v485, %v489
      %494 = vrot.lane.b32.xlu0 %v483, 127
      %v495 = vpop.permute.xlu0 %494
      %496 = vrot.lane.b32.xlu0 %v481, 127
      %v497 = vpop.permute.xlu0 %496
      %v498 = vsel %vm231, %v495, %v497
      %v502 = vsel %vm231, %v497, %v495
      %v503 = vsel %vm246, %v498, %v493
      %v504 = vsel %vm247, %v502, %v490
      %v505 = vsel %vm259, %v493, %v498
      %v506 = vsel %vm260, %v490, %v502
      %507 = vst [vmem:[#allocation2] sm:$0xf] %v503
      %508 = vst [vmem:[#allocation2 + $0x8] sm:$0xf] %v504
      %v509 = vrot.slane %v483, 4
      %v510 = vrot.slane %v481, 4
      %513 = vst [vmem:[#allocation2] sm:$0xf0] %v509
      %514 = vst [vmem:[#allocation2 + $0x8] sm:$0xf0] %v510
      %515 = vst [vmem:[#allocation2 + $0x10] sm:$0xf] %v505
      %516 = vst [vmem:[#allocation2 + $0x18] sm:$0xf] %v506
      %517 = vrot.lane.b32.xlu0 %v470, 1
      %v518 = vpop.permute.xlu0 %517
      %520 = vrot.lane.b32.xlu0 %v469, 1
      %v521 = vpop.permute.xlu0 %520
      %v522 = vsel %vm222, %v521, %v518
      %v525 = vsel %vm222, %v518, %v521
      %526 = vrot.lane.b32.xlu0 %v469, 127
      %v527 = vpop.permute.xlu0 %526
      %528 = vrot.lane.b32.xlu0 %v470, 127
      %v529 = vpop.permute.xlu0 %528
      %v530 = vsel %vm231, %v527, %v529
      %v534 = vsel %vm231, %v529, %v527
      %v535 = vsel %vm246, %v530, %v525
      %v536 = vsel %vm247, %v534, %v522
      %v537 = vsel %vm259, %v525, %v530
      %v538 = vsel %vm260, %v522, %v534
      %v541 = vrot.slane %v535, 4
      %v542 = vrot.slane %v536, 4
      %545 = vst [vmem:[#allocation2 + $0x10] sm:$0xf0] %v541
      %546 = vst [vmem:[#allocation2 + $0x18] sm:$0xf0] %v542
      %547 = vst [vmem:[#allocation2 + $0x20] sm:$0xf] %v469
      %548 = vst [vmem:[#allocation2 + $0x28] sm:$0xf] %v470
      %v551 = vrot.slane %v537, 4
      %v552 = vrot.slane %v538, 4
      %555 = vst [vmem:[#allocation2 + $0x20] sm:$0xf0] %v551
      %556 = vst [vmem:[#allocation2 + $0x28] sm:$0xf0] %v552
      %557 = vrot.lane.b32.xlu0 %v470, 112
      %v558 = vpop.permute.xlu0 %557
      %v559 = vsel %vm316, %v474, %v558
      %v562 = vsel %vm316, %v558, %v480
      %564 = vrot.lane.b32.xlu0 %v562, 1
      %v565 = vpop.permute.xlu0 %564
      %567 = vrot.lane.b32.xlu0 %v559, 1
      %v568 = vpop.permute.xlu0 %567
      %v569 = vsel %vm222, %v568, %v565
      %v572 = vsel %vm222, %v565, %v568
      %573 = vrot.lane.b32.xlu0 %v559, 127
      %v574 = vpop.permute.xlu0 %573
      %575 = vrot.lane.b32.xlu0 %v562, 127
      %v576 = vpop.permute.xlu0 %575
      %v577 = vsel %vm231, %v574, %v576
      %v581 = vsel %vm231, %v576, %v574
      %v582 = vsel %vm246, %v577, %v572
      %v583 = vsel %vm247, %v581, %v569
      %v584 = vsel %vm259, %v572, %v577
      %v585 = vsel %vm260, %v569, %v581
      %586 = vst [vmem:[#allocation2 + $0x30] sm:$0xf] %v582
      %587 = vst [vmem:[#allocation2 + $0x38] sm:$0xf] %v583
      %v588 = vrot.slane %v559, 4
      %v589 = vrot.slane %v562, 4
      %592 = vst [vmem:[#allocation2 + $0x30] sm:$0xf0] %v588
      %593 = vst [vmem:[#allocation2 + $0x38] sm:$0xf0] %v589
      %594 = vst [vmem:[#allocation2 + $0x40] sm:$0xf] %v584
      %595 = vst [vmem:[#allocation2 + $0x48] sm:$0xf] %v585
      %v596 = vld [vmem:[#allocation2] sm:$0xff]
      %v597 = vld [vmem:[#allocation2 + $0x8] sm:$0xff]
      %v598 = vld [vmem:[#allocation2 + $0x10] sm:$0xff]
      %v599 = vld [vmem:[#allocation2 + $0x18] sm:$0xff]
      %v600 = vld [vmem:[#allocation2 + $0x20] sm:$0xff]
      %v601 = vld [vmem:[#allocation2 + $0x28] sm:$0xff]
      %v602 = vld [vmem:[#allocation2 + $0x30] sm:$0xff]
      %v603 = vld [vmem:[#allocation2 + $0x38] sm:$0xff]
      %v604 = vld [vmem:[#allocation2 + $0x40] sm:$0xf]
      %v605 = vld [vmem:[#allocation2 + $0x48] sm:$0xf]
      %v607 = vsel %vm364, %v471, 0
      %v610 = vsel %vm368, %v604, 0
      %v613 = vsel %vm368, %v605, 0
      %615 = vmatprep.subr.mxu0 %v597
      %616 = vmatpush1.msra.mxu0 %v596
      %617 = vmatprep.subr.mxu0 %v599
      %618 = vmatpush1.msra.mxu0 %v598
      %619 = vmatprep.subr.mxu0 %v601
      %620 = vmatpush1.msra.mxu0 %v600
      %621 = vmatprep.subr.mxu0 %v603
      %622 = vmatpush1.msra.mxu0 %v602
      %623 = vmatprep.subr.mxu0 %v613
      %624 = vmatpush1.msra.mxu0 %v610
      %625 = vmatprep.subr.mxu0 0.0
      %626 = vmatpush1.msra.mxu0 0.0
      %627 = vmatprep.subr.mxu0 0.0
      %628 = vmatpush1.msra.mxu0 0.0
      %629 = vmatprep.subr.mxu0 0.0
      %630 = vmatpush1.msra.mxu0 0.0
      %631 = vmatprep.subr.mxu0 0.0
      %632 = vmatpush1.msra.mxu0 0.0
      %633 = vmatprep.subr.mxu0 0.0
      %634 = vmatpush1.msra.mxu0 0.0
      %635 = vmatprep.subr.mxu0 0.0
      %636 = vmatpush1.msra.mxu0 0.0
      %637 = vmatprep.subr.mxu0 0.0
      %638 = vmatpush1.msra.mxu0 0.0
      %639 = vmatprep.subr.mxu0 0.0
      %640 = vmatpush1.msra.mxu0 0.0
      %641 = vmatprep.subr.mxu0 0.0
      %642 = vmatpush1.msra.mxu0 0.0
      %643 = vmatprep.subr.mxu0 0.0
      %644 = vmatpush1.msra.mxu0 0.0
      %645 = vmatprep.subr.mxu0 0.0
      %646 = vmatpush1.msra.mxu0 0.0
      %647 = vmatprep.subr.mxu0 0.0
      %648 = vmatpush1.msra.mxu0 0.0
      %649 = vmatprep.subr.mxu0 0.0
      %650 = vmatpush1.msra.mxu0 0.0
      %651 = vmatprep.subr.mxu0 0.0
      %652 = vmatpush1.msra.mxu0 0.0
      %653 = vmatprep.subr.mxu0 0.0
      %654 = vmatpush1.msra.mxu0 0.0
      %655 = vmatprep.subr.mxu0 0.0
      %656 = vmatpush1.msra.mxu0 0.0
      %657 = vmatprep.subr.mxu0 0.0
      %658 = vmatpush1.msra.mxu0 0.0
      %659 = vmatprep.subr.mxu0 0.0
      %660 = vmatpush1.msra.mxu0 0.0
      %661 = vmatprep.subr.mxu0 0.0
      %662 = vmatpush1.msra.mxu0 0.0
      %663 = vmatprep.subr.mxu0 0.0
      %664 = vmatpush1.msra.mxu0 0.0
      %665 = vmatprep.subr.mxu0 0.0
      %666 = vmatpush1.msra.mxu0 0.0
      %667 = vmatprep.subr.mxu0 0.0
      %668 = vmatpush1.msra.mxu0 0.0
      %669 = vmatprep.subr.mxu0 0.0
      %670 = vmatpush1.msra.mxu0 0.0
      %671 = vmatprep.subr.mxu0 0.0
      %672 = vmatpush1.msra.mxu0 0.0
      %673 = vmatprep.subr.mxu0 0.0
      %674 = vmatpush1.msra.mxu0 0.0
      %675 = vmatprep.subr.mxu0 0.0
      %676 = vmatpush1.msra.mxu0 0.0
      %677 = vmatprep.subr.mxu0 0.0
      %678 = vmatpush1.msra.mxu0 0.0
      %679 = vmatprep.mubr.f32.mxu0 0.0
      %680 = vmatmul.mubr.f32.gmra.mrb[0].mxu0 %v607
      %v681 = vpop.f32.mrb[0].mxu0
      %v682 = vadd.f32 0.0, %v681
      %v683 = vpop.f32.mrb[0].mxu0
      %v684 = vadd.f32 0.0, %v683
      %685 = vdwg.mxu0
      %v686 = vsel %vm368, %v682, 0.0
      %v687 = vsel %vm368, %v684, 0.0
      %v688 = vadd.f32 %v686, %v687
      %689 = vadd.xlane.f32.xlu0 %v688
      %v690 = vpop.xlane.xlu0 %689
      %v691 = vmul.f32 %v690, 0.00390625
      %v692 = vmul.f32 %v682, %v682
      %v693 = vmul.f32 %v684, %v684
      %v694 = vsel %vm368, %v692, 0.0
      %v695 = vsel %vm368, %v693, 0.0
      %v696 = vadd.f32 %v694, %v695
      %697 = vadd.xlane.f32.xlu0 %v696
      %v698 = vpop.xlane.xlu0 %697
      %v699 = vmul.f32 %v698, 0.00390625
      %v700 = vmul.f32 %v691, %v691
      %v701 = vsub.f32 %v699, %v700
      %v702 = vmax.f32 %v701, 0.0
      %v703 = vsub.f32 %v682, %v691
      %v704 = vsub.f32 %v684, %v691
      %v705 = vadd.f32 %v702, 1e-05
      %v706 = vrsqrt.pop %v705
      %v707 = vmul.f32 %v703, %v706
      %v708 = vmul.f32 %v704, %v706
      %v711 = vcombine.low %v707, %v708
      %v713 = vadd.f32 %v198, %v711
      %714 = vst [vmem:[%s197] sm:$0xff] %v713
      %p715 = scmp.lt.s32.totalorder %s15, 1
      %s716 = scalar_select %p715, %s15, 1
      %s717 = smul.addr %s716, 2
      %s718 = smul.addr %s717, 4
      %s719 = scalar_lea.vmem %s4, %s718
      // Predicated region
      $region37: #{resnet_block_forward.1} parent=35 // pred_check
        %p720 = pneg %p122
      $region38: #{resnet_block_forward.1} parent=35 // pred_check_branch
        %722 = sbr.rel (%p720) target = $region40
      $region39: #{resnet_block_forward.1} parent=35 // pred_region
        _
      $region40: #{resnet_block_forward.1} parent=35 // pred_fallthru
        _
    $region36: #{resnet_block_forward.1} parent=5 // pred_fallthru
      _
    %p723 = scmp.le.s32.totalorder 2, %s10
    // Predicated region
    $region41: #{resnet_block_forward.1} parent=5 // pred_check
      %p724 = pneg %p723
    $region42: #{resnet_block_forward.1} parent=5 // pred_check_branch
      %726 = sbr.rel (%p724) target = $region44
    $region43: #{resnet_block_forward.1} parent=5 // pred_region
      %s727 = ssub.s32 %s10, 2
      // Predicated region
      $region45: #{resnet_block_forward.1} parent=43 // pred_check
        %p728 = pneg %p128
      $region46: #{resnet_block_forward.1} parent=43 // pred_check_branch
        %730 = sbr.rel (%p728) target = $region48
      $region47: #{resnet_block_forward.1} parent=43 // pred_region
        %p731 = scmp.lt.s32.totalorder %s16, 1
        %s732 = scalar_select %p731, %s16, 1
        %s733 = smul.addr %s732, 2
        %s734 = smul.addr %s733, 4
        %s735 = scalar_lea.vmem %s4, %s734
      $region48: #{resnet_block_forward.1} parent=43 // pred_fallthru
        _
    $region44: #{resnet_block_forward.1} parent=5 // pred_fallthru
      _
  $region6: #{resnet_block_forward.1} parent=0 // loop_footer
    %s14 = sadd.s32 1, %s10
  $region7: #{resnet_block_forward.1} parent=0 // loop_footer_branch
    %9 = sbr.rel target = $region3
  $region8: #{resnet_block_forward.1} parent=0 // loop_exit
    _

</llo_original>
